<compile_context>
chip_gen: v7x
topology: tpu7x:2x2x1
jax: 0.10.0
libtpu: 0.0.40
codegen_flags: <defaults>
</compile_context>

<pallas_src>
import functools
import math

import jax
import jax.numpy as jnp
from jax.experimental import pallas as pl
from jax.experimental.pallas import tpu as pltpu

_LANES = 128


def _morlet_taps(kernel_size):
    """Real Morlet taps as Python floats, identical to the PyTorch module's fixed kernel."""
    if kernel_size == 1:
        times = [-3.0]
    else:
        step = 6.0 / (kernel_size - 1)
        times = [-3.0 + step * i for i in range(kernel_size)]
    return [float(math.cos(5.0 * u) * math.exp(-(u * u) / 2.0)) for u in times]


def _wavelet_kernel(xpad_ref, out_ref, *, taps, dilations, kernel_size, W, pad_lanes,
                    num_t_tiles):
    """One grid step: all scales for one (batch tile, T tile).

    xpad_ref: (BB, Cn, 128)         resident zero-padded signal, chunked along T
    out_ref:  (n_scales, BB, W, 128) this T tile's output (scale-major, lane-dense)
    """
    L = _LANES
    BB = xpad_ref.shape[0]

    # Chunk offset of this T tile inside the resident padded slab.  Static 0 for the
    # single-tile case so the toy config lowers with fully static slices.
    if num_t_tiles == 1:
        t_chunk0 = 0
    else:
        t_chunk0 = pl.multiple_of(pl.program_id(1) * W, W)

    # Hoisted lane iota (JAX does not CSE broadcast_in_dim inside loops).
    lane = jax.lax.broadcasted_iota(jnp.int32, (BB, W, L), 2)

    for j, dil in enumerate(dilations):                      # static scale loop (collapsed)
        padding = (kernel_size - 1) * dil // 2               # F.conv1d 'same' padding
        acc = jnp.zeros((BB, W, L), jnp.float32)
        for k, w_k in enumerate(taps):                       # static (unrolled) tap loop
            # Element offset of this tap's window inside the padded slab.
            c = pad_lanes - padding + k * dil                # static, >= 0
            q, r = divmod(c, L)                              # chunk / lane split (static)
            start = t_chunk0 + q
            if r == 0:
                win = xpad_ref[:, pl.ds(start, W), :]        # ref-sliced tap load
            else:
                # Window straddles a lane boundary: stitch two chunk-aligned ref loads with
                # a static lane rotate (XLU) + select (VPU); both units have huge slack.
                a = pltpu.roll(xpad_ref[:, pl.ds(start, W), :], L - r, axis=2)
                b = pltpu.roll(xpad_ref[:, pl.ds(start + 1, W), :], L - r, axis=2)
                win = jnp.where(lane < L - r, a, b)
            acc = acc + w_k * win.astype(jnp.float32)        # immediate-constant MAC (VPU)
        out_ref[j] = acc.astype(out_ref.dtype)               # per-scale dense store


def wavelet_forward(x, S=None, kernel_size=5, *, t_tile=2048, out_dtype=None):
    """x: (B, 1, T).  Returns (B, 1, T, n_scales), matching WaveletLayer.forward."""
    B, Cin, T = x.shape
    assert Cin == 1, "WaveletLayer expects a single-channel signal"
    K = kernel_size
    # F.conv1d only preserves length T when (K-1)*dilation is even; even K would also make
    # torch.cat fail in the reference module (scale 0 would have length T-1).
    assert K % 2 == 1, "kernel_size must be odd for 'same'-length multi-scale outputs"
    L = _LANES

    n_scales = S if S is not None else max(1, int(math.log2(T / K)))
    dilations = [2 ** j for j in range(n_scales)]
    max_pad = (K - 1) * dilations[-1] // 2                   # largest per-scale padding
    taps = _morlet_taps(K)                                    # fixed taps, baked as immediates

    # ---- T tiling: output-only; the padded input slab stays resident per batch tile ----
    pad_chunks = -(-max_pad // L)
    P = pad_chunks * L                                        # lane-aligned left pad >= max_pad
    t_tile = max(1024, -(-t_tile // 1024) * 1024)             # keep W = Tt/128 a multiple of 8
    Tp0 = -(-T // L) * L
    Tt = Tp0 if Tp0 <= t_tile else t_tile                     # single tile for small T
    Tp = -(-T // Tt) * Tt                                     # padded T, multiple of Tt
    W = Tt // L                                               # chunks per output tile
    num_t_tiles = Tp // Tt
    Cn = (Tp + 2 * P) // L                                    # padded-input chunks
    Cout = Tp // L

    # ---- batch tiling: full batch when small, 8-row (sublane-multiple) tiles when large ----
    if B <= 8:
        BB, Bp = B, B
    else:
        BB, Bp = 8, -(-B // 8) * 8

    # Zero-pad + chunk the signal: (Bp, Cn, 128).  The pads cover the largest dilation's
    # halo so every scale's window is a pure shift of the same resident slab.
    # TODO(synk): fold this pad into the producer (or zero-fill a VMEM slab in-kernel via
    # manual DMA) to save one extra HBM pass over the input on this write-bound op.
    xpad = jnp.pad(x[:, 0, :], ((0, Bp - B), (P, P + (Tp - T)))).reshape(Bp, Cn, L)

    out_dtype = x.dtype if out_dtype is None else out_dtype   # pass bf16 to halve HBM writes

    # VMEM budget (review): resident input slab (x2 buffers, conservative) + double-buffered
    # output block + a few (BB, Tt) temps; kept well under v7x's 64 MiB physical VMEM.
    in_bytes = 2 * BB * Cn * L * x.dtype.itemsize
    out_bytes = 2 * n_scales * BB * Tt * jnp.dtype(out_dtype).itemsize
    tmp_bytes = 4 * BB * Tt * 4
    vmem_limit = int(min(64 * 2 ** 20,
                         max(32 * 2 ** 20, 1.25 * (in_bytes + out_bytes + tmp_bytes))))

    kern = functools.partial(
        _wavelet_kernel, taps=taps, dilations=dilations, kernel_size=K,
        W=W, pad_lanes=P, num_t_tiles=num_t_tiles)

    out = pl.pallas_call(
        kern,
        out_shape=jax.ShapeDtypeStruct((n_scales, Bp, Cout, L), out_dtype),
        grid=(Bp // BB, num_t_tiles),
        in_specs=[
            # Resident padded slab: the index_map ignores the T-tile axis, so Pallas keeps
            # the same block across consecutive t steps (no halo re-read from HBM).
            pl.BlockSpec((BB, Cn, L), lambda i, t: (i, 0, 0)),
        ],
        # Scale-major output block -> out_ref[j] is one contiguous (BB, W, 128) dense store.
        # TODO(synk): pipeline_mode=pl.Buffered(3) here if the writeback DMA is still exposed.
        out_specs=pl.BlockSpec((n_scales, BB, W, L), lambda i, t: (0, i, t, 0)),
        compiler_params=pltpu.CompilerParams(
            dimension_semantics=("parallel", "parallel"),     # both TCs busy on v7x
            vmem_limit_bytes=vmem_limit,
        ),
    )(xpad)

    # (n_scales, Bp, Cout, 128) -> (n_scales, B, T) -> (B, T, n_scales) -> (B, 1, T, n_scales)
    # NOTE: the final transpose to the PyTorch layout costs one extra HBM pass; callers that
    # can consume (n_scales, B, T) directly should skip it.
    out = out.reshape(n_scales, Bp, Tp)[:, :B, :T]
    return jnp.transpose(out, (1, 2, 0))[:, None, :, :]


def _reference(x, S=None, kernel_size=5):
    """Independent reference using lax.conv_general_dilated (mirrors F.conv1d)."""
    B, Cin, T = x.shape
    K = kernel_size
    w = jnp.asarray(_morlet_taps(K), jnp.float32).reshape(1, 1, K)
    n_scales = S if S is not None else max(1, int(math.log2(T / K)))
    outs = []
    for j in range(n_scales):
        scale = 2 ** j
        pad = (K - 1) * scale // 2
        out = jax.lax.conv_general_dilated(
            x.astype(jnp.float32), w,
            window_strides=(1,),
            padding=[(pad, pad)],
            rhs_dilation=(scale,),
            dimension_numbers=("NCH", "OIH", "NCH"),
            precision=jax.lax.Precision.HIGHEST,
        )
        outs.append(out[..., None])
    return jnp.concatenate(outs, axis=-1).astype(x.dtype)


if __name__ == "__main__":
    root = jax.random.PRNGKey(0)
    k1, k2 = jax.random.split(root)

    # 1) The module's toy config: x=(2, 1, 64), S=None, kernel_size=5 -> n_scales=3.
    #    Single T tile -> fully static slices.
    x1 = jax.random.normal(k1, (2, 1, 64), dtype=jnp.float32)
    out1 = jax.block_until_ready(wavelet_forward(x1, S=None, kernel_size=5))
    ref1 = _reference(x1, S=None, kernel_size=5)
    assert out1.shape == ref1.shape, (out1.shape, ref1.shape)
    assert jnp.allclose(out1, ref1, atol=1e-4, rtol=1e-4), float(jnp.max(jnp.abs(out1 - ref1)))

    # 2) Longer signal + small t_tile: exercises the T-tiled path (dynamic chunk offsets,
    #    resident input slab across T steps) and the B>8 batch-tiling path.
    x2 = jax.random.normal(k2, (9, 1, 2048), dtype=jnp.float32)
    out2 = jax.block_until_ready(wavelet_forward(x2, S=None, kernel_size=5, t_tile=1024))
    ref2 = _reference(x2, S=None, kernel_size=5)
    assert out2.shape == ref2.shape, (out2.shape, ref2.shape)
    assert jnp.allclose(out2, ref2, atol=1e-4, rtol=1e-4), float(jnp.max(jnp.abs(out2 - ref2)))

    print("KERNEL_OK")
</pallas_src>

<mosaic_0001>
module attributes {stable_mosaic.version = 11 : i64} {
  func.func @_wavelet_kernel(%arg0: i32, %arg1: i32, %arg2: memref<2x3x128xf32, #tpu.memory_space<vmem>>, %arg3: memref<3x2x1x128xf32, #tpu.memory_space<vmem>>) attributes {dimension_semantics = [#tpu.dimension_semantics<parallel>, #tpu.dimension_semantics<parallel>], iteration_bounds = array<i64: 1, 1>, scalar_prefetch = 0 : i64, scratch_operands = 0 : i64, tpu.core_type = #tpu.core_type<tc>, window_params = [{transform_indices = @transform_0, window_bounds = array<i64: 2, 3, 128>}, {transform_indices = @transform_1, window_bounds = array<i64: 3, 2, 1, 128>}]} {
    %0 = tpu.iota {dimensions = array<i32: 2>} : vector<2x1x128xi32>
    %cst = arith.constant 0.000000e+00 : f32
    %1 = vector.broadcast %cst : f32 to vector<2x1x128xf32>
    %c0 = arith.constant 0 : index
    %c0_0 = arith.constant 0 : index
    %c0_1 = arith.constant 0 : index
    %2 = vector.load %arg2[%c0, %c0_0, %c0_1] : memref<2x3x128xf32, #tpu.memory_space<vmem>>, vector<2x1x128xf32>
    %c2_i32 = arith.constant 2 : i32
    %3 = tpu.dynamic_rotate %2 by %c2_i32 dim 2 : vector<2x1x128xf32>, i32 -> vector<2x1x128xf32>
    %c0_2 = arith.constant 0 : index
    %c1 = arith.constant 1 : index
    %c0_3 = arith.constant 0 : index
    %4 = vector.load %arg2[%c0_2, %c1, %c0_3] : memref<2x3x128xf32, #tpu.memory_space<vmem>>, vector<2x1x128xf32>
    %c2_i32_4 = arith.constant 2 : i32
    %5 = tpu.dynamic_rotate %4 by %c2_i32_4 dim 2 : vector<2x1x128xf32>, i32 -> vector<2x1x128xf32>
    %c2_i32_5 = arith.constant 2 : i32
    %6 = vector.broadcast %c2_i32_5 : i32 to vector<2x1x128xi32>
    %7 = arith.cmpi slt, %0, %6 : vector<2x1x128xi32>
    %8 = arith.select %7, %3, %5 : vector<2x1x128xi1>, vector<2x1x128xf32>
    %cst_6 = arith.constant -8.439370e-03 : f32
    %9 = vector.broadcast %cst_6 : f32 to vector<2x1x128xf32>
    %10 = arith.mulf %9, %8 : vector<2x1x128xf32>
    %11 = arith.addf %1, %10 : vector<2x1x128xf32>
    %c0_7 = arith.constant 0 : index
    %c0_8 = arith.constant 0 : index
    %c0_9 = arith.constant 0 : index
    %12 = vector.load %arg2[%c0_7, %c0_8, %c0_9] : memref<2x3x128xf32, #tpu.memory_space<vmem>>, vector<2x1x128xf32>
    %c1_i32 = arith.constant 1 : i32
    %13 = tpu.dynamic_rotate %12 by %c1_i32 dim 2 : vector<2x1x128xf32>, i32 -> vector<2x1x128xf32>
    %c0_10 = arith.constant 0 : index
    %c1_11 = arith.constant 1 : index
    %c0_12 = arith.constant 0 : index
    %14 = vector.load %arg2[%c0_10, %c1_11, %c0_12] : memref<2x3x128xf32, #tpu.memory_space<vmem>>, vector<2x1x128xf32>
    %c1_i32_13 = arith.constant 1 : i32
    %15 = tpu.dynamic_rotate %14 by %c1_i32_13 dim 2 : vector<2x1x128xf32>, i32 -> vector<2x1x128xf32>
    %c1_i32_14 = arith.constant 1 : i32
    %16 = vector.broadcast %c1_i32_14 : i32 to vector<2x1x128xi32>
    %17 = arith.cmpi slt, %0, %16 : vector<2x1x128xi32>
    %18 = arith.select %17, %13, %15 : vector<2x1x128xi1>, vector<2x1x128xf32>
    %cst_15 = arith.constant 0.112536013 : f32
    %19 = vector.broadcast %cst_15 : f32 to vector<2x1x128xf32>
    %20 = arith.mulf %19, %18 : vector<2x1x128xf32>
    %21 = arith.addf %11, %20 : vector<2x1x128xf32>
    %c0_16 = arith.constant 0 : index
    %c1_17 = arith.constant 1 : index
    %c0_18 = arith.constant 0 : index
    %22 = vector.load %arg2[%c0_16, %c1_17, %c0_18] : memref<2x3x128xf32, #tpu.memory_space<vmem>>, vector<2x1x128xf32>
    %cst_19 = arith.constant 1.000000e+00 : f32
    %23 = vector.broadcast %cst_19 : f32 to vector<2x1x128xf32>
    %24 = arith.mulf %23, %22 : vector<2x1x128xf32>
    %25 = arith.addf %21, %24 : vector<2x1x128xf32>
    %c0_20 = arith.constant 0 : index
    %c1_21 = arith.constant 1 : index
    %c0_22 = arith.constant 0 : index
    %26 = vector.load %arg2[%c0_20, %c1_21, %c0_22] : memref<2x3x128xf32, #tpu.memory_space<vmem>>, vector<2x1x128xf32>
    %c127_i32 = arith.constant 127 : i32
    %27 = tpu.dynamic_rotate %26 by %c127_i32 dim 2 : vector<2x1x128xf32>, i32 -> vector<2x1x128xf32>
    %c0_23 = arith.constant 0 : index
    %c2 = arith.constant 2 : index
    %c0_24 = arith.constant 0 : index
    %28 = vector.load %arg2[%c0_23, %c2, %c0_24] : memref<2x3x128xf32, #tpu.memory_space<vmem>>, vector<2x1x128xf32>
    %c127_i32_25 = arith.constant 127 : i32
    %29 = tpu.dynamic_rotate %28 by %c127_i32_25 dim 2 : vector<2x1x128xf32>, i32 -> vector<2x1x128xf32>
    %c127_i32_26 = arith.constant 127 : i32
    %30 = vector.broadcast %c127_i32_26 : i32 to vector<2x1x128xi32>
    %31 = arith.cmpi slt, %0, %30 : vector<2x1x128xi32>
    %32 = arith.select %31, %27, %29 : vector<2x1x128xi1>, vector<2x1x128xf32>
    %cst_27 = arith.constant 0.112536013 : f32
    %33 = vector.broadcast %cst_27 : f32 to vector<2x1x128xf32>
    %34 = arith.mulf %33, %32 : vector<2x1x128xf32>
    %35 = arith.addf %25, %34 : vector<2x1x128xf32>
    %c0_28 = arith.constant 0 : index
    %c1_29 = arith.constant 1 : index
    %c0_30 = arith.constant 0 : index
    %36 = vector.load %arg2[%c0_28, %c1_29, %c0_30] : memref<2x3x128xf32, #tpu.memory_space<vmem>>, vector<2x1x128xf32>
    %c126_i32 = arith.constant 126 : i32
    %37 = tpu.dynamic_rotate %36 by %c126_i32 dim 2 : vector<2x1x128xf32>, i32 -> vector<2x1x128xf32>
    %c0_31 = arith.constant 0 : index
    %c2_32 = arith.constant 2 : index
    %c0_33 = arith.constant 0 : index
    %38 = vector.load %arg2[%c0_31, %c2_32, %c0_33] : memref<2x3x128xf32, #tpu.memory_space<vmem>>, vector<2x1x128xf32>
    %c126_i32_34 = arith.constant 126 : i32
    %39 = tpu.dynamic_rotate %38 by %c126_i32_34 dim 2 : vector<2x1x128xf32>, i32 -> vector<2x1x128xf32>
    %c126_i32_35 = arith.constant 126 : i32
    %40 = vector.broadcast %c126_i32_35 : i32 to vector<2x1x128xi32>
    %41 = arith.cmpi slt, %0, %40 : vector<2x1x128xi32>
    %42 = arith.select %41, %37, %39 : vector<2x1x128xi1>, vector<2x1x128xf32>
    %cst_36 = arith.constant -8.439370e-03 : f32
    %43 = vector.broadcast %cst_36 : f32 to vector<2x1x128xf32>
    %44 = arith.mulf %43, %42 : vector<2x1x128xf32>
    %45 = arith.addf %35, %44 : vector<2x1x128xf32>
    %c0_37 = arith.constant 0 : index
    %c0_38 = arith.constant 0 : index
    %c0_39 = arith.constant 0 : index
    %c0_40 = arith.constant 0 : index
    %46 = vector.load %arg3[%c0_37, %c0_38, %c0_39, %c0_40] : memref<3x2x1x128xf32, #tpu.memory_space<vmem>>, vector<1x2x1x128xf32>
    %47 = vector.shape_cast %46 : vector<1x2x1x128xf32> to vector<2x1x128xf32>
    %48 = vector.shape_cast %45 : vector<2x1x128xf32> to vector<1x2x1x128xf32>
    tpu.vector_store %arg3[%c0_37, %c0_38, %c0_39, %c0_40], %48 {strides = array<i32>} : memref<3x2x1x128xf32, #tpu.memory_space<vmem>>, vector<1x2x1x128xf32>,
    %cst_41 = arith.constant 0.000000e+00 : f32
    %49 = vector.broadcast %cst_41 : f32 to vector<2x1x128xf32>
    %c0_42 = arith.constant 0 : index
    %c0_43 = arith.constant 0 : index
    %c0_44 = arith.constant 0 : index
    %50 = vector.load %arg2[%c0_42, %c0_43, %c0_44] : memref<2x3x128xf32, #tpu.memory_space<vmem>>, vector<2x1x128xf32>
    %c4_i32 = arith.constant 4 : i32
    %51 = tpu.dynamic_rotate %50 by %c4_i32 dim 2 : vector<2x1x128xf32>, i32 -> vector<2x1x128xf32>
    %c0_45 = arith.constant 0 : index
    %c1_46 = arith.constant 1 : index
    %c0_47 = arith.constant 0 : index
    %52 = vector.load %arg2[%c0_45, %c1_46, %c0_47] : memref<2x3x128xf32, #tpu.memory_space<vmem>>, vector<2x1x128xf32>
    %c4_i32_48 = arith.constant 4 : i32
    %53 = tpu.dynamic_rotate %52 by %c4_i32_48 dim 2 : vector<2x1x128xf32>, i32 -> vector<2x1x128xf32>
    %c4_i32_49 = arith.constant 4 : i32
    %54 = vector.broadcast %c4_i32_49 : i32 to vector<2x1x128xi32>
    %55 = arith.cmpi slt, %0, %54 : vector<2x1x128xi32>
    %56 = arith.select %55, %51, %53 : vector<2x1x128xi1>, vector<2x1x128xf32>
    %cst_50 = arith.constant -8.439370e-03 : f32
    %57 = vector.broadcast %cst_50 : f32 to vector<2x1x128xf32>
    %58 = arith.mulf %57, %56 : vector<2x1x128xf32>
    %59 = arith.addf %49, %58 : vector<2x1x128xf32>
    %c0_51 = arith.constant 0 : index
    %c0_52 = arith.constant 0 : index
    %c0_53 = arith.constant 0 : index
    %60 = vector.load %arg2[%c0_51, %c0_52, %c0_53] : memref<2x3x128xf32, #tpu.memory_space<vmem>>, vector<2x1x128xf32>
    %c2_i32_54 = arith.constant 2 : i32
    %61 = tpu.dynamic_rotate %60 by %c2_i32_54 dim 2 : vector<2x1x128xf32>, i32 -> vector<2x1x128xf32>
    %c0_55 = arith.constant 0 : index
    %c1_56 = arith.constant 1 : index
    %c0_57 = arith.constant 0 : index
    %62 = vector.load %arg2[%c0_55, %c1_56, %c0_57] : memref<2x3x128xf32, #tpu.memory_space<vmem>>, vector<2x1x128xf32>
    %c2_i32_58 = arith.constant 2 : i32
    %63 = tpu.dynamic_rotate %62 by %c2_i32_58 dim 2 : vector<2x1x128xf32>, i32 -> vector<2x1x128xf32>
    %c2_i32_59 = arith.constant 2 : i32
    %64 = vector.broadcast %c2_i32_59 : i32 to vector<2x1x128xi32>
    %65 = arith.cmpi slt, %0, %64 : vector<2x1x128xi32>
    %66 = arith.select %65, %61, %63 : vector<2x1x128xi1>, vector<2x1x128xf32>
    %cst_60 = arith.constant 0.112536013 : f32
    %67 = vector.broadcast %cst_60 : f32 to vector<2x1x128xf32>
    %68 = arith.mulf %67, %66 : vector<2x1x128xf32>
    %69 = arith.addf %59, %68 : vector<2x1x128xf32>
    %c0_61 = arith.constant 0 : index
    %c1_62 = arith.constant 1 : index
    %c0_63 = arith.constant 0 : index
    %70 = vector.load %arg2[%c0_61, %c1_62, %c0_63] : memref<2x3x128xf32, #tpu.memory_space<vmem>>, vector<2x1x128xf32>
    %cst_64 = arith.constant 1.000000e+00 : f32
    %71 = vector.broadcast %cst_64 : f32 to vector<2x1x128xf32>
    %72 = arith.mulf %71, %70 : vector<2x1x128xf32>
    %73 = arith.addf %69, %72 : vector<2x1x128xf32>
    %c0_65 = arith.constant 0 : index
    %c1_66 = arith.constant 1 : index
    %c0_67 = arith.constant 0 : index
    %74 = vector.load %arg2[%c0_65, %c1_66, %c0_67] : memref<2x3x128xf32, #tpu.memory_space<vmem>>, vector<2x1x128xf32>
    %c126_i32_68 = arith.constant 126 : i32
    %75 = tpu.dynamic_rotate %74 by %c126_i32_68 dim 2 : vector<2x1x128xf32>, i32 -> vector<2x1x128xf32>
    %c0_69 = arith.constant 0 : index
    %c2_70 = arith.constant 2 : index
    %c0_71 = arith.constant 0 : index
    %76 = vector.load %arg2[%c0_69, %c2_70, %c0_71] : memref<2x3x128xf32, #tpu.memory_space<vmem>>, vector<2x1x128xf32>
    %c126_i32_72 = arith.constant 126 : i32
    %77 = tpu.dynamic_rotate %76 by %c126_i32_72 dim 2 : vector<2x1x128xf32>, i32 -> vector<2x1x128xf32>
    %c126_i32_73 = arith.constant 126 : i32
    %78 = vector.broadcast %c126_i32_73 : i32 to vector<2x1x128xi32>
    %79 = arith.cmpi slt, %0, %78 : vector<2x1x128xi32>
    %80 = arith.select %79, %75, %77 : vector<2x1x128xi1>, vector<2x1x128xf32>
    %cst_74 = arith.constant 0.112536013 : f32
    %81 = vector.broadcast %cst_74 : f32 to vector<2x1x128xf32>
    %82 = arith.mulf %81, %80 : vector<2x1x128xf32>
    %83 = arith.addf %73, %82 : vector<2x1x128xf32>
    %c0_75 = arith.constant 0 : index
    %c1_76 = arith.constant 1 : index
    %c0_77 = arith.constant 0 : index
    %84 = vector.load %arg2[%c0_75, %c1_76, %c0_77] : memref<2x3x128xf32, #tpu.memory_space<vmem>>, vector<2x1x128xf32>
    %c124_i32 = arith.constant 124 : i32
    %85 = tpu.dynamic_rotate %84 by %c124_i32 dim 2 : vector<2x1x128xf32>, i32 -> vector<2x1x128xf32>
    %c0_78 = arith.constant 0 : index
    %c2_79 = arith.constant 2 : index
    %c0_80 = arith.constant 0 : index
    %86 = vector.load %arg2[%c0_78, %c2_79, %c0_80] : memref<2x3x128xf32, #tpu.memory_space<vmem>>, vector<2x1x128xf32>
    %c124_i32_81 = arith.constant 124 : i32
    %87 = tpu.dynamic_rotate %86 by %c124_i32_81 dim 2 : vector<2x1x128xf32>, i32 -> vector<2x1x128xf32>
    %c124_i32_82 = arith.constant 124 : i32
    %88 = vector.broadcast %c124_i32_82 : i32 to vector<2x1x128xi32>
    %89 = arith.cmpi slt, %0, %88 : vector<2x1x128xi32>
    %90 = arith.select %89, %85, %87 : vector<2x1x128xi1>, vector<2x1x128xf32>
    %cst_83 = arith.constant -8.439370e-03 : f32
    %91 = vector.broadcast %cst_83 : f32 to vector<2x1x128xf32>
    %92 = arith.mulf %91, %90 : vector<2x1x128xf32>
    %93 = arith.addf %83, %92 : vector<2x1x128xf32>
    %c1_84 = arith.constant 1 : index
    %c0_85 = arith.constant 0 : index
    %c0_86 = arith.constant 0 : index
    %c0_87 = arith.constant 0 : index
    %94 = vector.load %arg3[%c1_84, %c0_85, %c0_86, %c0_87] : memref<3x2x1x128xf32, #tpu.memory_space<vmem>>, vector<1x2x1x128xf32>
    %95 = vector.shape_cast %94 : vector<1x2x1x128xf32> to vector<2x1x128xf32>
    %96 = vector.shape_cast %93 : vector<2x1x128xf32> to vector<1x2x1x128xf32>
    tpu.vector_store %arg3[%c1_84, %c0_85, %c0_86, %c0_87], %96 {strides = array<i32>} : memref<3x2x1x128xf32, #tpu.memory_space<vmem>>, vector<1x2x1x128xf32>,
    %cst_88 = arith.constant 0.000000e+00 : f32
    %97 = vector.broadcast %cst_88 : f32 to vector<2x1x128xf32>
    %c0_89 = arith.constant 0 : index
    %c0_90 = arith.constant 0 : index
    %c0_91 = arith.constant 0 : index
    %98 = vector.load %arg2[%c0_89, %c0_90, %c0_91] : memref<2x3x128xf32, #tpu.memory_space<vmem>>, vector<2x1x128xf32>
    %c8_i32 = arith.constant 8 : i32
    %99 = tpu.dynamic_rotate %98 by %c8_i32 dim 2 : vector<2x1x128xf32>, i32 -> vector<2x1x128xf32>
    %c0_92 = arith.constant 0 : index
    %c1_93 = arith.constant 1 : index
    %c0_94 = arith.constant 0 : index
    %100 = vector.load %arg2[%c0_92, %c1_93, %c0_94] : memref<2x3x128xf32, #tpu.memory_space<vmem>>, vector<2x1x128xf32>
    %c8_i32_95 = arith.constant 8 : i32
    %101 = tpu.dynamic_rotate %100 by %c8_i32_95 dim 2 : vector<2x1x128xf32>, i32 -> vector<2x1x128xf32>
    %c8_i32_96 = arith.constant 8 : i32
    %102 = vector.broadcast %c8_i32_96 : i32 to vector<2x1x128xi32>
    %103 = arith.cmpi slt, %0, %102 : vector<2x1x128xi32>
    %104 = arith.select %103, %99, %101 : vector<2x1x128xi1>, vector<2x1x128xf32>
    %cst_97 = arith.constant -8.439370e-03 : f32
    %105 = vector.broadcast %cst_97 : f32 to vector<2x1x128xf32>
    %106 = arith.mulf %105, %104 : vector<2x1x128xf32>
    %107 = arith.addf %97, %106 : vector<2x1x128xf32>
    %c0_98 = arith.constant 0 : index
    %c0_99 = arith.constant 0 : index
    %c0_100 = arith.constant 0 : index
    %108 = vector.load %arg2[%c0_98, %c0_99, %c0_100] : memref<2x3x128xf32, #tpu.memory_space<vmem>>, vector<2x1x128xf32>
    %c4_i32_101 = arith.constant 4 : i32
    %109 = tpu.dynamic_rotate %108 by %c4_i32_101 dim 2 : vector<2x1x128xf32>, i32 -> vector<2x1x128xf32>
    %c0_102 = arith.constant 0 : index
    %c1_103 = arith.constant 1 : index
    %c0_104 = arith.constant 0 : index
    %110 = vector.load %arg2[%c0_102, %c1_103, %c0_104] : memref<2x3x128xf32, #tpu.memory_space<vmem>>, vector<2x1x128xf32>
    %c4_i32_105 = arith.constant 4 : i32
    %111 = tpu.dynamic_rotate %110 by %c4_i32_105 dim 2 : vector<2x1x128xf32>, i32 -> vector<2x1x128xf32>
    %c4_i32_106 = arith.constant 4 : i32
    %112 = vector.broadcast %c4_i32_106 : i32 to vector<2x1x128xi32>
    %113 = arith.cmpi slt, %0, %112 : vector<2x1x128xi32>
    %114 = arith.select %113, %109, %111 : vector<2x1x128xi1>, vector<2x1x128xf32>
    %cst_107 = arith.constant 0.112536013 : f32
    %115 = vector.broadcast %cst_107 : f32 to vector<2x1x128xf32>
    %116 = arith.mulf %115, %114 : vector<2x1x128xf32>
    %117 = arith.addf %107, %116 : vector<2x1x128xf32>
    %c0_108 = arith.constant 0 : index
    %c1_109 = arith.constant 1 : index
    %c0_110 = arith.constant 0 : index
    %118 = vector.load %arg2[%c0_108, %c1_109, %c0_110] : memref<2x3x128xf32, #tpu.memory_space<vmem>>, vector<2x1x128xf32>
    %cst_111 = arith.constant 1.000000e+00 : f32
    %119 = vector.broadcast %cst_111 : f32 to vector<2x1x128xf32>
    %120 = arith.mulf %119, %118 : vector<2x1x128xf32>
    %121 = arith.addf %117, %120 : vector<2x1x128xf32>
    %c0_112 = arith.constant 0 : index
    %c1_113 = arith.constant 1 : index
    %c0_114 = arith.constant 0 : index
    %122 = vector.load %arg2[%c0_112, %c1_113, %c0_114] : memref<2x3x128xf32, #tpu.memory_space<vmem>>, vector<2x1x128xf32>
    %c124_i32_115 = arith.constant 124 : i32
    %123 = tpu.dynamic_rotate %122 by %c124_i32_115 dim 2 : vector<2x1x128xf32>, i32 -> vector<2x1x128xf32>
    %c0_116 = arith.constant 0 : index
    %c2_117 = arith.constant 2 : index
    %c0_118 = arith.constant 0 : index
    %124 = vector.load %arg2[%c0_116, %c2_117, %c0_118] : memref<2x3x128xf32, #tpu.memory_space<vmem>>, vector<2x1x128xf32>
    %c124_i32_119 = arith.constant 124 : i32
    %125 = tpu.dynamic_rotate %124 by %c124_i32_119 dim 2 : vector<2x1x128xf32>, i32 -> vector<2x1x128xf32>
    %c124_i32_120 = arith.constant 124 : i32
    %126 = vector.broadcast %c124_i32_120 : i32 to vector<2x1x128xi32>
    %127 = arith.cmpi slt, %0, %126 : vector<2x1x128xi32>
    %128 = arith.select %127, %123, %125 : vector<2x1x128xi1>, vector<2x1x128xf32>
    %cst_121 = arith.constant 0.112536013 : f32
    %129 = vector.broadcast %cst_121 : f32 to vector<2x1x128xf32>
    %130 = arith.mulf %129, %128 : vector<2x1x128xf32>
    %131 = arith.addf %121, %130 : vector<2x1x128xf32>
    %c0_122 = arith.constant 0 : index
    %c1_123 = arith.constant 1 : index
    %c0_124 = arith.constant 0 : index
    %132 = vector.load %arg2[%c0_122, %c1_123, %c0_124] : memref<2x3x128xf32, #tpu.memory_space<vmem>>, vector<2x1x128xf32>
    %c120_i32 = arith.constant 120 : i32
    %133 = tpu.dynamic_rotate %132 by %c120_i32 dim 2 : vector<2x1x128xf32>, i32 -> vector<2x1x128xf32>
    %c0_125 = arith.constant 0 : index
    %c2_126 = arith.constant 2 : index
    %c0_127 = arith.constant 0 : index
    %134 = vector.load %arg2[%c0_125, %c2_126, %c0_127] : memref<2x3x128xf32, #tpu.memory_space<vmem>>, vector<2x1x128xf32>
    %c120_i32_128 = arith.constant 120 : i32
    %135 = tpu.dynamic_rotate %134 by %c120_i32_128 dim 2 : vector<2x1x128xf32>, i32 -> vector<2x1x128xf32>
    %c120_i32_129 = arith.constant 120 : i32
    %136 = vector.broadcast %c120_i32_129 : i32 to vector<2x1x128xi32>
    %137 = arith.cmpi slt, %0, %136 : vector<2x1x128xi32>
    %138 = arith.select %137, %133, %135 : vector<2x1x128xi1>, vector<2x1x128xf32>
    %cst_130 = arith.constant -8.439370e-03 : f32
    %139 = vector.broadcast %cst_130 : f32 to vector<2x1x128xf32>
    %140 = arith.mulf %139, %138 : vector<2x1x128xf32>
    %141 = arith.addf %131, %140 : vector<2x1x128xf32>
    %c2_131 = arith.constant 2 : index
    %c0_132 = arith.constant 0 : index
    %c0_133 = arith.constant 0 : index
    %c0_134 = arith.constant 0 : index
    %142 = vector.load %arg3[%c2_131, %c0_132, %c0_133, %c0_134] : memref<3x2x1x128xf32, #tpu.memory_space<vmem>>, vector<1x2x1x128xf32>
    %143 = vector.shape_cast %142 : vector<1x2x1x128xf32> to vector<2x1x128xf32>
    %144 = vector.shape_cast %141 : vector<2x1x128xf32> to vector<1x2x1x128xf32>
    tpu.vector_store %arg3[%c2_131, %c0_132, %c0_133, %c0_134], %144 {strides = array<i32>} : memref<3x2x1x128xf32, #tpu.memory_space<vmem>>, vector<1x2x1x128xf32>,
    return
  }
  func.func @transform_0(%arg0: i32, %arg1: i32) -> (i32, i32, i32) {
    %c0_i32 = arith.constant 0 : i32
    %c0_i32_0 = arith.constant 0 : i32
    %c0_i32_1 = arith.constant 0 : i32
    return %arg0, %c0_i32, %c0_i32_0 : i32, i32, i32
  }
  func.func @transform_1(%arg0: i32, %arg1: i32) -> (i32, i32, i32, i32) {
    %c0_i32 = arith.constant 0 : i32
    %c0_i32_0 = arith.constant 0 : i32
    %c0_i32_1 = arith.constant 0 : i32
    return %c0_i32, %arg0, %arg1, %c0_i32_0 : i32, i32, i32, i32
  }
}

</mosaic_0001>

<llo_original>
// kernel: tpu_custom_call.1
$region0: #{tpu_custom_call.1}
  #allocation0 [shape = 'u32[]', space=smem, size = 0x4, offset = 0x4, fixed_abs, tag = 'smem constant byte address 0x4 - core index']
  #allocation1 [shape = 'u32[144,128]{1,0:T(1,128)}', space=vmem, size = 0x12000, scoped, tag = 'internal scratch']
  %s0 = inlined_call_operand.vmem [shape: f32[2,3,128], index: 0, kind: input, shape index: {}]
  %s1 = inlined_call_operand.hbm [shape: f32[3,2,1,128], index: 1, kind: output, shape index: {}]
  %s2 = sld [smem:[#allocation0]]
  $region14: #{tpu_custom_call.1} parent=0
    _
  %s4 = ssub.s32 1, %s2
  %s5 = scalar_select 0, %s4, %s2
  $region1: #{tpu_custom_call.1} parent=0
    #allocation2 [shape = 'u8[3072]{0}', space=vmem, size = 0xc00, scoped, tag = 'output window, operand 0, single buffered']
    #allocation3 [shape = 's32[1]{0}', space=sflag, size = 0x4, scoped, tag = 'scoped memory for tpu_custom_call.1']
    %6 = vsyncpa [#allocation3], 0
    // Predicated region
    $region2: #{tpu_custom_call.1} parent=1 // pred_check
      _
    $region3: #{tpu_custom_call.1} parent=1 // pred_check_branch
      %8 = sbr.rel (0) target = $region5
    $region4: #{tpu_custom_call.1} parent=1 // pred_region
      _
    $region5: #{tpu_custom_call.1} parent=1 // pred_fallthru
      _
    %v9 = vlaneseq
    %v10 = vand.u32 %v9, 127
    %v11 = vld [vmem:[%s0] sm:$0x1]
    %v12 = vld [vmem:[%s0 + $0x4] sm:$0x1]
    %13 = vrot.lane.b32.xlu0 %v11, 2
    %v14 = vpop.permute.xlu0 %13
    %15 = vrot.lane.b32.xlu0 %v12, 2
    %v16 = vpop.permute.xlu0 %15
    %v17 = vld [vmem:[%s0 + $0x1] sm:$0x1]
    %v18 = vld [vmem:[%s0 + $0x5] sm:$0x1]
    %19 = vrot.lane.b32.xlu0 %v17, 2
    %v20 = vpop.permute.xlu0 %19
    %21 = vrot.lane.b32.xlu0 %v18, 2
    %v22 = vpop.permute.xlu0 %21
    %vm23 = vcmp.lt.s32.totalorder %v10, 2
    %v24 = vsel %vm23, %v14, %v20
    %v25 = vsel %vm23, %v16, %v22
    %v26 = vmul.f32 %v24, -0.00843937
    %v27 = vmul.f32 %v25, -0.00843937
    %v28 = vadd.f32 %v26, 0.0
    %v29 = vadd.f32 %v27, 0.0
    %30 = vrot.lane.b32.xlu0 %v11, 1
    %v31 = vpop.permute.xlu0 %30
    %32 = vrot.lane.b32.xlu0 %v12, 1
    %v33 = vpop.permute.xlu0 %32
    %34 = vrot.lane.b32.xlu0 %v17, 1
    %v35 = vpop.permute.xlu0 %34
    %36 = vrot.lane.b32.xlu0 %v18, 1
    %v37 = vpop.permute.xlu0 %36
    %vm38 = vcmp.lt.s32.totalorder %v10, 1
    %v39 = vsel %vm38, %v31, %v35
    %v40 = vsel %vm38, %v33, %v37
    %v41 = vmul.f32 %v39, 0.11253601
    %v42 = vmul.f32 %v40, 0.11253601
    %v43 = vadd.f32 %v28, %v41
    %v44 = vadd.f32 %v29, %v42
    %v45 = vadd.f32 %v43, %v17
    %v46 = vadd.f32 %v44, %v18
    %47 = vrot.lane.b32.xlu0 %v17, 127
    %v48 = vpop.permute.xlu0 %47
    %49 = vrot.lane.b32.xlu0 %v18, 127
    %v50 = vpop.permute.xlu0 %49
    %v51 = vld [vmem:[%s0 + $0x2] sm:$0x1]
    %v52 = vld [vmem:[%s0 + $0x6] sm:$0x1]
    %53 = vrot.lane.b32.xlu0 %v51, 127
    %v54 = vpop.permute.xlu0 %53
    %55 = vrot.lane.b32.xlu0 %v52, 127
    %v56 = vpop.permute.xlu0 %55
    %vm57 = vcmp.lt.s32.totalorder %v10, 127
    %v58 = vsel %vm57, %v48, %v54
    %v59 = vsel %vm57, %v50, %v56
    %v60 = vmul.f32 %v58, 0.11253601
    %v61 = vmul.f32 %v59, 0.11253601
    %v62 = vadd.f32 %v45, %v60
    %v63 = vadd.f32 %v46, %v61
    %64 = vrot.lane.b32.xlu0 %v17, 126
    %v65 = vpop.permute.xlu0 %64
    %66 = vrot.lane.b32.xlu0 %v18, 126
    %v67 = vpop.permute.xlu0 %66
    %68 = vrot.lane.b32.xlu0 %v51, 126
    %v69 = vpop.permute.xlu0 %68
    %70 = vrot.lane.b32.xlu0 %v52, 126
    %v71 = vpop.permute.xlu0 %70
    %vm72 = vcmp.lt.s32.totalorder %v10, 126
    %v73 = vsel %vm72, %v65, %v69
    %v74 = vsel %vm72, %v67, %v71
    %v75 = vmul.f32 %v73, -0.00843937
    %v76 = vmul.f32 %v74, -0.00843937
    %v77 = vadd.f32 %v62, %v75
    %v78 = vadd.f32 %v63, %v76
    %79 = vst [vmem:[#allocation2] sm:$0x1] %v77
    %80 = vst [vmem:[#allocation2 + $0x1] sm:$0x1] %v78
    %v81 = vld [vmem:[%s0] sm:$0x1]
    %v82 = vld [vmem:[%s0 + $0x4] sm:$0x1]
    %83 = vrot.lane.b32.xlu0 %v81, 4
    %v84 = vpop.permute.xlu0 %83
    %85 = vrot.lane.b32.xlu0 %v82, 4
    %v86 = vpop.permute.xlu0 %85
    %v87 = vld [vmem:[%s0 + $0x1] sm:$0x1]
    %v88 = vld [vmem:[%s0 + $0x5] sm:$0x1]
    %89 = vrot.lane.b32.xlu0 %v87, 4
    %v90 = vpop.permute.xlu0 %89
    %91 = vrot.lane.b32.xlu0 %v88, 4
    %v92 = vpop.permute.xlu0 %91
    %vm93 = vcmp.lt.s32.totalorder %v10, 4
    %v94 = vsel %vm93, %v84, %v90
    %v95 = vsel %vm93, %v86, %v92
    %v96 = vmul.f32 %v94, -0.00843937
    %v97 = vmul.f32 %v95, -0.00843937
    %v98 = vadd.f32 %v96, 0.0
    %v99 = vadd.f32 %v97, 0.0
    %100 = vrot.lane.b32.xlu0 %v81, 2
    %v101 = vpop.permute.xlu0 %100
    %102 = vrot.lane.b32.xlu0 %v82, 2
    %v103 = vpop.permute.xlu0 %102
    %104 = vrot.lane.b32.xlu0 %v87, 2
    %v105 = vpop.permute.xlu0 %104
    %106 = vrot.lane.b32.xlu0 %v88, 2
    %v107 = vpop.permute.xlu0 %106
    %v108 = vsel %vm23, %v101, %v105
    %v109 = vsel %vm23, %v103, %v107
    %v110 = vmul.f32 %v108, 0.11253601
    %v111 = vmul.f32 %v109, 0.11253601
    %v112 = vadd.f32 %v98, %v110
    %v113 = vadd.f32 %v99, %v111
    %v114 = vadd.f32 %v112, %v87
    %v115 = vadd.f32 %v113, %v88
    %116 = vrot.lane.b32.xlu0 %v87, 126
    %v117 = vpop.permute.xlu0 %116
    %118 = vrot.lane.b32.xlu0 %v88, 126
    %v119 = vpop.permute.xlu0 %118
    %v120 = vld [vmem:[%s0 + $0x2] sm:$0x1]
    %v121 = vld [vmem:[%s0 + $0x6] sm:$0x1]
    %122 = vrot.lane.b32.xlu0 %v120, 126
    %v123 = vpop.permute.xlu0 %122
    %124 = vrot.lane.b32.xlu0 %v121, 126
    %v125 = vpop.permute.xlu0 %124
    %v126 = vsel %vm72, %v117, %v123
    %v127 = vsel %vm72, %v119, %v125
    %v128 = vmul.f32 %v126, 0.11253601
    %v129 = vmul.f32 %v127, 0.11253601
    %v130 = vadd.f32 %v114, %v128
    %v131 = vadd.f32 %v115, %v129
    %132 = vrot.lane.b32.xlu0 %v87, 124
    %v133 = vpop.permute.xlu0 %132
    %134 = vrot.lane.b32.xlu0 %v88, 124
    %v135 = vpop.permute.xlu0 %134
    %136 = vrot.lane.b32.xlu0 %v120, 124
    %v137 = vpop.permute.xlu0 %136
    %138 = vrot.lane.b32.xlu0 %v121, 124
    %v139 = vpop.permute.xlu0 %138
    %vm140 = vcmp.lt.s32.totalorder %v10, 124
    %v141 = vsel %vm140, %v133, %v137
    %v142 = vsel %vm140, %v135, %v139
    %v143 = vmul.f32 %v141, -0.00843937
    %v144 = vmul.f32 %v142, -0.00843937
    %v145 = vadd.f32 %v130, %v143
    %v146 = vadd.f32 %v131, %v144
    %s147 = scalar_lea.vmem [#allocation2], 2
    %148 = vst [vmem:[%s147] sm:$0x1] %v145
    %149 = vst [vmem:[%s147 + $0x1] sm:$0x1] %v146
    %v150 = vld [vmem:[%s0] sm:$0x1]
    %v151 = vld [vmem:[%s0 + $0x4] sm:$0x1]
    %152 = vrot.lane.b32.xlu0 %v150, 8
    %v153 = vpop.permute.xlu0 %152
    %154 = vrot.lane.b32.xlu0 %v151, 8
    %v155 = vpop.permute.xlu0 %154
    %v156 = vld [vmem:[%s0 + $0x1] sm:$0x1]
    %v157 = vld [vmem:[%s0 + $0x5] sm:$0x1]
    %158 = vrot.lane.b32.xlu0 %v156, 8
    %v159 = vpop.permute.xlu0 %158
    %160 = vrot.lane.b32.xlu0 %v157, 8
    %v161 = vpop.permute.xlu0 %160
    %vm162 = vcmp.lt.s32.totalorder %v10, 8
    %v163 = vsel %vm162, %v153, %v159
    %v164 = vsel %vm162, %v155, %v161
    %v165 = vmul.f32 %v163, -0.00843937
    %v166 = vmul.f32 %v164, -0.00843937
    %v167 = vadd.f32 %v165, 0.0
    %v168 = vadd.f32 %v166, 0.0
    %169 = vrot.lane.b32.xlu0 %v150, 4
    %v170 = vpop.permute.xlu0 %169
    %171 = vrot.lane.b32.xlu0 %v151, 4
    %v172 = vpop.permute.xlu0 %171
    %173 = vrot.lane.b32.xlu0 %v156, 4
    %v174 = vpop.permute.xlu0 %173
    %175 = vrot.lane.b32.xlu0 %v157, 4
    %v176 = vpop.permute.xlu0 %175
    %v177 = vsel %vm93, %v170, %v174
    %v178 = vsel %vm93, %v172, %v176
    %v179 = vmul.f32 %v177, 0.11253601
    %v180 = vmul.f32 %v178, 0.11253601
    %v181 = vadd.f32 %v167, %v179
    %v182 = vadd.f32 %v168, %v180
    %v183 = vadd.f32 %v181, %v156
    %v184 = vadd.f32 %v182, %v157
    %185 = vrot.lane.b32.xlu0 %v156, 124
    %v186 = vpop.permute.xlu0 %185
    %187 = vrot.lane.b32.xlu0 %v157, 124
    %v188 = vpop.permute.xlu0 %187
    %v189 = vld [vmem:[%s0 + $0x2] sm:$0x1]
    %v190 = vld [vmem:[%s0 + $0x6] sm:$0x1]
    %191 = vrot.lane.b32.xlu0 %v189, 124
    %v192 = vpop.permute.xlu0 %191
    %193 = vrot.lane.b32.xlu0 %v190, 124
    %v194 = vpop.permute.xlu0 %193
    %v195 = vsel %vm140, %v186, %v192
    %v196 = vsel %vm140, %v188, %v194
    %v197 = vmul.f32 %v195, 0.11253601
    %v198 = vmul.f32 %v196, 0.11253601
    %v199 = vadd.f32 %v183, %v197
    %v200 = vadd.f32 %v184, %v198
    %201 = vrot.lane.b32.xlu0 %v156, 120
    %v202 = vpop.permute.xlu0 %201
    %203 = vrot.lane.b32.xlu0 %v157, 120
    %v204 = vpop.permute.xlu0 %203
    %205 = vrot.lane.b32.xlu0 %v189, 120
    %v206 = vpop.permute.xlu0 %205
    %207 = vrot.lane.b32.xlu0 %v190, 120
    %v208 = vpop.permute.xlu0 %207
    %vm209 = vcmp.lt.s32.totalorder %v10, 120
    %v210 = vsel %vm209, %v202, %v206
    %v211 = vsel %vm209, %v204, %v208
    %v212 = vmul.f32 %v210, -0.00843937
    %v213 = vmul.f32 %v211, -0.00843937
    %v214 = vadd.f32 %v199, %v212
    %v215 = vadd.f32 %v200, %v213
    %s216 = scalar_lea.vmem [#allocation2], 4
    %217 = vst [vmem:[%s216] sm:$0x1] %v214
    %218 = vst [vmem:[%s216 + $0x1] sm:$0x1] %v215
    // Predicated region
    $region6: #{tpu_custom_call.1} parent=1 // pred_check
      _
    $region7: #{tpu_custom_call.1} parent=1 // pred_check_branch
      %220 = sbr.rel (0) target = $region9
    $region8: #{tpu_custom_call.1} parent=1 // pred_region
      %s222 = ssub.s32 96, 96
      %223 = vsyncadd [#allocation3], %s222
      %s224 = sshll.u32 [#allocation2], 4
      %s225 = int_to_ptr.vmem [resolvable:$true] %s224
      %230 = dma.vmem_to_hbm [thread:$0]  %s225, 96, %s1, [#allocation3], 16, 16, 1
    $region9: #{tpu_custom_call.1} parent=1 // pred_fallthru
      _
    // Predicated region
    $region10: #{tpu_custom_call.1} parent=1 // pred_check
      _
    $region11: #{tpu_custom_call.1} parent=1 // pred_check_branch
      %232 = sbr.rel (0) target = $region13
    $region12: #{tpu_custom_call.1} parent=1 // pred_region
      %233 = dma.done [#allocation3], 96
    $region13: #{tpu_custom_call.1} parent=1 // pred_fallthru
      _
    %234 = vsyncpa [#allocation3], 1

</llo_original>
